<compile_context>
chip_gen: v7x
topology: tpu7x:2x2x1
jax: 0.10.0
libtpu: 0.0.40
codegen_flags: <defaults>
</compile_context>

<pallas_src>
import jax
import jax.numpy as jnp
from jax.experimental import pallas as pl
from jax.experimental.pallas import tpu as pltpu

LANE = 128      # lane width (last dim)
SUBLANE = 8     # sublane width (second-to-last dim)


def _round_up(n, m):
    return ((n + m - 1) // m) * m


def transform_kernel(x_ref,
                     w0_ref, b0_ref,   # Linear(input_dim  -> hidden_dim)
                     w1_ref, b1_ref,   # ResidualBlock fc (hidden -> hidden)
                     w2_ref, b2_ref,   # ResidualBlock fc (hidden -> hidden)
                     w3_ref, b3_ref,   # Linear(hidden_dim -> output_dim)
                     o_ref):
    # x = x.to(layer_dtype)  -- cast input to the parameter dtype (float32)
    x = x_ref[...].astype(jnp.float32)

    # layer 0: plain Linear
    h = jnp.dot(x, w0_ref[...], preferred_element_type=jnp.float32) + b0_ref[...]

    # residual block 1: relu(Linear(h)) + h
    r = jnp.dot(h, w1_ref[...], preferred_element_type=jnp.float32) + b1_ref[...]
    h = jnp.maximum(r, 0.0) + h

    # residual block 2: relu(Linear(h)) + h
    r = jnp.dot(h, w2_ref[...], preferred_element_type=jnp.float32) + b2_ref[...]
    h = jnp.maximum(r, 0.0) + h

    # final layer: plain Linear (output block is 128-lane padded -> dense store)
    out = jnp.dot(h, w3_ref[...], preferred_element_type=jnp.float32) + b3_ref[...]
    o_ref[...] = out.astype(o_ref.dtype)


def transform_model(x, params, *, tm=None):
    """params: list of 4 (w_t, b) pairs; w_t is (in_dim, out_dim), b is (1, out_dim)."""
    B, in_dim = x.shape
    out_dim = params[-1][0].shape[1]

    # --- pad all feature dims to 128 lanes (zero padding, semantics-preserving) ---
    in_pad = _round_up(in_dim, LANE)
    out_pad = _round_up(out_dim, LANE)

    padded_params = []
    for w_t, b in params:
        d_in, d_out = w_t.shape
        dip, dop = _round_up(d_in, LANE), _round_up(d_out, LANE)
        w_p = jnp.zeros((dip, dop), jnp.float32).at[:d_in, :d_out].set(w_t)
        b_p = jnp.zeros((1, dop), jnp.float32).at[:, :d_out].set(b)
        padded_params.append((w_p, b_p))

    x_p = x
    if in_pad != in_dim:
        x_p = jnp.pad(x, ((0, 0), (0, in_pad - in_dim)))

    # --- row tiling: one grid step for small batches, <=512-row tiles at scale ---
    if tm is None:
        tm = B if B <= 512 else 512
    tm = _round_up(min(tm, max(B, SUBLANE)), SUBLANE)
    B_pad = _round_up(B, tm)
    if B_pad != B:
        x_p = jnp.pad(x_p, ((0, B_pad - B), (0, 0)))

    x_spec = pl.BlockSpec((tm, in_pad), lambda i: (i, 0))
    param_specs = []
    flat_params = []
    for w_p, b_p in padded_params:
        # constant block index -> weights stay resident in VMEM across all steps
        param_specs.append(pl.BlockSpec(w_p.shape, lambda i: (0, 0)))
        param_specs.append(pl.BlockSpec(b_p.shape, lambda i: (0, 0)))
        flat_params.extend([w_p, b_p])

    out_spec = pl.BlockSpec((tm, out_pad), lambda i: (i, 0))

    out_padded = pl.pallas_call(
        transform_kernel,
        out_shape=jax.ShapeDtypeStruct((B_pad, out_pad), jnp.float32),
        grid_spec=pl.GridSpec(
            grid=(B_pad // tm,),
            in_specs=[x_spec] + param_specs,
            out_specs=out_spec,
        ),
        compiler_params=pltpu.CompilerParams(
            dimension_semantics=("parallel",),
            vmem_limit_bytes=64 << 20,   # headroom for 512-row tiles + resident weights
        ),
    )(x_p, *flat_params)

    # slice away the batch / output-feature padding
    return out_padded[:B, :out_dim]


def make_params(key, num_layers, input_dim, hidden_dim, output_dim):
    """Deterministic synthetic parameters (PyTorch Linear shapes, pre-transposed)."""
    dims = [(input_dim, hidden_dim)]
    for _ in range(num_layers - 2):
        dims.append((hidden_dim, hidden_dim))
    dims.append((hidden_dim, output_dim))

    params = []
    for (d_in, d_out) in dims:
        key, kw, kb = jax.random.split(key, 3)
        scale = 1.0 / jnp.sqrt(d_in)
        # stored directly as W^T = (in, out); equivalent to torch weight (out, in).T
        w_t = jax.random.uniform(kw, (d_in, d_out), jnp.float32, -scale, scale)
        b = jax.random.uniform(kb, (1, d_out), jnp.float32, -scale, scale)
        params.append((w_t, b))
    return params


def reference_forward(x, params):
    h = x.astype(jnp.float32)
    # layer 0
    h = h @ params[0][0] + params[0][1]
    # residual blocks
    for w_t, b in params[1:-1]:
        h = jnp.maximum(h @ w_t + b, 0.0) + h
    # final layer
    return h @ params[-1][0] + params[-1][1]


if __name__ == "__main__":
    # Small shapes consistent with TransformModel(num_layers=4, ...)
    NUM_LAYERS = 4
    INPUT_DIM = 128
    HIDDEN_DIM = 64    # exercises the 128-lane padding path
    OUTPUT_DIM = 32    # exercises the 128-lane padding path
    BATCH = 16

    key = jax.random.PRNGKey(0)
    key, kx = jax.random.split(key)
    x = jax.random.normal(kx, (BATCH, INPUT_DIM), jnp.float32)
    params = make_params(key, NUM_LAYERS, INPUT_DIM, HIDDEN_DIM, OUTPUT_DIM)

    out = transform_model(x, params)
    out = jax.block_until_ready(out)

    ref = reference_forward(x, params)
    assert out.shape == (BATCH, OUTPUT_DIM)
    assert jnp.allclose(out, ref, atol=1e-4, rtol=1e-4), "mismatch vs reference"

    print("KERNEL_OK")
</pallas_src>

<mosaic_0001>
module attributes {stable_mosaic.version = 11 : i64} {
  func.func @transform_kernel(%arg0: i32, %arg1: memref<16x128xf32, #tpu.memory_space<vmem>>, %arg2: memref<128x128xf32, #tpu.memory_space<vmem>>, %arg3: memref<1x128xf32, #tpu.memory_space<vmem>>, %arg4: memref<128x128xf32, #tpu.memory_space<vmem>>, %arg5: memref<1x128xf32, #tpu.memory_space<vmem>>, %arg6: memref<128x128xf32, #tpu.memory_space<vmem>>, %arg7: memref<1x128xf32, #tpu.memory_space<vmem>>, %arg8: memref<128x128xf32, #tpu.memory_space<vmem>>, %arg9: memref<1x128xf32, #tpu.memory_space<vmem>>, %arg10: memref<16x128xf32, #tpu.memory_space<vmem>>) attributes {dimension_semantics = [#tpu.dimension_semantics<parallel>], iteration_bounds = array<i64: 1>, scalar_prefetch = 0 : i64, scratch_operands = 0 : i64, tpu.core_type = #tpu.core_type<tc>, window_params = [{transform_indices = @transform_0, window_bounds = array<i64: 16, 128>}, {pipeline_mode = #tpu.pipeline_mode<synchronous>, transform_indices = @transform_1, window_bounds = array<i64: 128, 128>}, {pipeline_mode = #tpu.pipeline_mode<synchronous>, transform_indices = @transform_2, window_bounds = array<i64: 1, 128>}, {pipeline_mode = #tpu.pipeline_mode<synchronous>, transform_indices = @transform_3, window_bounds = array<i64: 128, 128>}, {pipeline_mode = #tpu.pipeline_mode<synchronous>, transform_indices = @transform_4, window_bounds = array<i64: 1, 128>}, {pipeline_mode = #tpu.pipeline_mode<synchronous>, transform_indices = @transform_5, window_bounds = array<i64: 128, 128>}, {pipeline_mode = #tpu.pipeline_mode<synchronous>, transform_indices = @transform_6, window_bounds = array<i64: 1, 128>}, {pipeline_mode = #tpu.pipeline_mode<synchronous>, transform_indices = @transform_7, window_bounds = array<i64: 128, 128>}, {pipeline_mode = #tpu.pipeline_mode<synchronous>, transform_indices = @transform_8, window_bounds = array<i64: 1, 128>}, {transform_indices = @transform_9, window_bounds = array<i64: 16, 128>}]} {
    %c0 = arith.constant 0 : index
    %c0_0 = arith.constant 0 : index
    %0 = vector.load %arg1[%c0, %c0_0] : memref<16x128xf32, #tpu.memory_space<vmem>>, vector<16x128xf32>
    %c0_1 = arith.constant 0 : index
    %c0_2 = arith.constant 0 : index
    %1 = vector.load %arg2[%c0_1, %c0_2] : memref<128x128xf32, #tpu.memory_space<vmem>>, vector<128x128xf32>
    %cst = arith.constant dense<0.000000e+00> : vector<16x128xf32>
    %2 = tpu.matmul %0, %1, %cst {dimension_numbers = #tpu.dot_dimension_numbers<[1], [0], [0], [1], [0, 0, 1, 1], [], []>} : vector<16x128xf32>, vector<128x128xf32>, vector<16x128xf32> -> vector<16x128xf32>
    %c0_3 = arith.constant 0 : index
    %c0_4 = arith.constant 0 : index
    %3 = vector.load %arg3[%c0_3, %c0_4] : memref<1x128xf32, #tpu.memory_space<vmem>>, vector<1x128xf32>
    %4 = vector.broadcast %3 : vector<1x128xf32> to vector<16x128xf32>
    %5 = arith.addf %2, %4 : vector<16x128xf32>
    %c0_5 = arith.constant 0 : index
    %c0_6 = arith.constant 0 : index
    %6 = vector.load %arg4[%c0_5, %c0_6] : memref<128x128xf32, #tpu.memory_space<vmem>>, vector<128x128xf32>
    %cst_7 = arith.constant dense<0.000000e+00> : vector<16x128xf32>
    %7 = tpu.matmul %5, %6, %cst_7 {dimension_numbers = #tpu.dot_dimension_numbers<[1], [0], [0], [1], [0, 0, 1, 1], [], []>} : vector<16x128xf32>, vector<128x128xf32>, vector<16x128xf32> -> vector<16x128xf32>
    %c0_8 = arith.constant 0 : index
    %c0_9 = arith.constant 0 : index
    %8 = vector.load %arg5[%c0_8, %c0_9] : memref<1x128xf32, #tpu.memory_space<vmem>>, vector<1x128xf32>
    %9 = vector.broadcast %8 : vector<1x128xf32> to vector<16x128xf32>
    %10 = arith.addf %7, %9 : vector<16x128xf32>
    %cst_10 = arith.constant 0.000000e+00 : f32
    %11 = vector.broadcast %cst_10 : f32 to vector<16x128xf32>
    %12 = arith.maximumf %10, %11 : vector<16x128xf32>
    %13 = arith.addf %12, %5 : vector<16x128xf32>
    %c0_11 = arith.constant 0 : index
    %c0_12 = arith.constant 0 : index
    %14 = vector.load %arg6[%c0_11, %c0_12] : memref<128x128xf32, #tpu.memory_space<vmem>>, vector<128x128xf32>
    %cst_13 = arith.constant dense<0.000000e+00> : vector<16x128xf32>
    %15 = tpu.matmul %13, %14, %cst_13 {dimension_numbers = #tpu.dot_dimension_numbers<[1], [0], [0], [1], [0, 0, 1, 1], [], []>} : vector<16x128xf32>, vector<128x128xf32>, vector<16x128xf32> -> vector<16x128xf32>
    %c0_14 = arith.constant 0 : index
    %c0_15 = arith.constant 0 : index
    %16 = vector.load %arg7[%c0_14, %c0_15] : memref<1x128xf32, #tpu.memory_space<vmem>>, vector<1x128xf32>
    %17 = vector.broadcast %16 : vector<1x128xf32> to vector<16x128xf32>
    %18 = arith.addf %15, %17 : vector<16x128xf32>
    %cst_16 = arith.constant 0.000000e+00 : f32
    %19 = vector.broadcast %cst_16 : f32 to vector<16x128xf32>
    %20 = arith.maximumf %18, %19 : vector<16x128xf32>
    %21 = arith.addf %20, %13 : vector<16x128xf32>
    %c0_17 = arith.constant 0 : index
    %c0_18 = arith.constant 0 : index
    %22 = vector.load %arg8[%c0_17, %c0_18] : memref<128x128xf32, #tpu.memory_space<vmem>>, vector<128x128xf32>
    %cst_19 = arith.constant dense<0.000000e+00> : vector<16x128xf32>
    %23 = tpu.matmul %21, %22, %cst_19 {dimension_numbers = #tpu.dot_dimension_numbers<[1], [0], [0], [1], [0, 0, 1, 1], [], []>} : vector<16x128xf32>, vector<128x128xf32>, vector<16x128xf32> -> vector<16x128xf32>
    %c0_20 = arith.constant 0 : index
    %c0_21 = arith.constant 0 : index
    %24 = vector.load %arg9[%c0_20, %c0_21] : memref<1x128xf32, #tpu.memory_space<vmem>>, vector<1x128xf32>
    %25 = vector.broadcast %24 : vector<1x128xf32> to vector<16x128xf32>
    %26 = arith.addf %23, %25 : vector<16x128xf32>
    %c0_22 = arith.constant 0 : index
    %c0_23 = arith.constant 0 : index
    %27 = vector.load %arg10[%c0_22, %c0_23] : memref<16x128xf32, #tpu.memory_space<vmem>>, vector<16x128xf32>
    tpu.vector_store %arg10[%c0_22, %c0_23], %26 {strides = array<i32>} : memref<16x128xf32, #tpu.memory_space<vmem>>, vector<16x128xf32>,
    return
  }
  func.func @transform_0(%arg0: i32) -> (i32, i32) {
    %c0_i32 = arith.constant 0 : i32
    %c0_i32_0 = arith.constant 0 : i32
    return %arg0, %c0_i32 : i32, i32
  }
  func.func @transform_1(%arg0: i32) -> (i32, i32) {
    %c0_i32 = arith.constant 0 : i32
    %c0_i32_0 = arith.constant 0 : i32
    %c0_i32_1 = arith.constant 0 : i32
    return %c0_i32, %c0_i32_0 : i32, i32
  }
  func.func @transform_2(%arg0: i32) -> (i32, i32) {
    %c0_i32 = arith.constant 0 : i32
    %c0_i32_0 = arith.constant 0 : i32
    %c0_i32_1 = arith.constant 0 : i32
    return %c0_i32, %c0_i32_0 : i32, i32
  }
  func.func @transform_3(%arg0: i32) -> (i32, i32) {
    %c0_i32 = arith.constant 0 : i32
    %c0_i32_0 = arith.constant 0 : i32
    %c0_i32_1 = arith.constant 0 : i32
    return %c0_i32, %c0_i32_0 : i32, i32
  }
  func.func @transform_4(%arg0: i32) -> (i32, i32) {
    %c0_i32 = arith.constant 0 : i32
    %c0_i32_0 = arith.constant 0 : i32
    %c0_i32_1 = arith.constant 0 : i32
    return %c0_i32, %c0_i32_0 : i32, i32
  }
  func.func @transform_5(%arg0: i32) -> (i32, i32) {
    %c0_i32 = arith.constant 0 : i32
    %c0_i32_0 = arith.constant 0 : i32
    %c0_i32_1 = arith.constant 0 : i32
    return %c0_i32, %c0_i32_0 : i32, i32
  }
  func.func @transform_6(%arg0: i32) -> (i32, i32) {
    %c0_i32 = arith.constant 0 : i32
    %c0_i32_0 = arith.constant 0 : i32
    %c0_i32_1 = arith.constant 0 : i32
    return %c0_i32, %c0_i32_0 : i32, i32
  }
  func.func @transform_7(%arg0: i32) -> (i32, i32) {
    %c0_i32 = arith.constant 0 : i32
    %c0_i32_0 = arith.constant 0 : i32
    %c0_i32_1 = arith.constant 0 : i32
    return %c0_i32, %c0_i32_0 : i32, i32
  }
  func.func @transform_8(%arg0: i32) -> (i32, i32) {
    %c0_i32 = arith.constant 0 : i32
    %c0_i32_0 = arith.constant 0 : i32
    %c0_i32_1 = arith.constant 0 : i32
    return %c0_i32, %c0_i32_0 : i32, i32
  }
  func.func @transform_9(%arg0: i32) -> (i32, i32) {
    %c0_i32 = arith.constant 0 : i32
    %c0_i32_0 = arith.constant 0 : i32
    return %arg0, %c0_i32 : i32, i32
  }
}

</mosaic_0001>

<llo_original>
// kernel: tpu_custom_call.1
$region0: #{tpu_custom_call.1}
  #allocation0 [shape = 'u32[]', space=smem, size = 0x4, offset = 0x4, fixed_abs, tag = 'smem constant byte address 0x4 - core index']
  #allocation1 [shape = 'u32[144,128]{1,0:T(1,128)}', space=vmem, size = 0x12000, scoped, tag = 'internal scratch']
  %s0 = inlined_call_operand.hbm [shape: f32[16,128], index: 0, kind: input, shape index: {}]
  %s1 = inlined_call_operand.hbm [shape: f32[128,128], index: 1, kind: input, shape index: {}]
  %s2 = inlined_call_operand.hbm [shape: f32[1,128], index: 2, kind: input, shape index: {}]
  %s3 = inlined_call_operand.hbm [shape: f32[128,128], index: 3, kind: input, shape index: {}]
  %s4 = inlined_call_operand.hbm [shape: f32[1,128], index: 4, kind: input, shape index: {}]
  %s5 = inlined_call_operand.hbm [shape: f32[128,128], index: 5, kind: input, shape index: {}]
  %s6 = inlined_call_operand.hbm [shape: f32[1,128], index: 6, kind: input, shape index: {}]
  %s7 = inlined_call_operand.hbm [shape: f32[128,128], index: 7, kind: input, shape index: {}]
  %s8 = inlined_call_operand.hbm [shape: f32[1,128], index: 8, kind: input, shape index: {}]
  %s9 = inlined_call_operand.hbm [shape: f32[16,128], index: 9, kind: output, shape index: {}]
  %s10 = sld [smem:[#allocation0]]
  $region82: #{tpu_custom_call.1} parent=0
    _
  %s12 = ssub.s32 1, %s10
  %s13 = scalar_select 0, %s12, %s10
  $region1: #{tpu_custom_call.1} parent=0
    #allocation2 [shape = 'u8[8192]{0}', space=vmem, size = 0x2000, scoped, tag = 'input window, operand 0, single buffered']
    #allocation3 [shape = 's32[1]{0}', space=sflag, size = 0x4, scoped, tag = 'scoped memory for tpu_custom_call.1']
    #allocation4 [shape = 's32[1]{0}', space=sflag, size = 0x4, scoped, tag = 'scoped memory for tpu_custom_call.1']
    #allocation5 [shape = 'u8[65536]{0}', space=vmem, size = 0x10000, scoped, tag = 'input window, operand 1, single buffered']
    #allocation6 [shape = 's32[1]{0}', space=sflag, size = 0x4, scoped, tag = 'scoped memory for tpu_custom_call.1']
    #allocation7 [shape = 'u8[512]{0}', space=vmem, size = 0x400, scoped, tag = 'input window, operand 2, single buffered']
    #allocation8 [shape = 'u8[65536]{0}', space=vmem, size = 0x10000, scoped, tag = 'input window, operand 3, single buffered']
    #allocation9 [shape = 's32[1]{0}', space=sflag, size = 0x4, scoped, tag = 'scoped memory for tpu_custom_call.1']
    #allocation10 [shape = 'u8[512]{0}', space=vmem, size = 0x400, scoped, tag = 'input window, operand 4, single buffered']
    #allocation11 [shape = 'u8[65536]{0}', space=vmem, size = 0x10000, scoped, tag = 'input window, operand 5, single buffered']
    #allocation12 [shape = 's32[1]{0}', space=sflag, size = 0x4, scoped, tag = 'scoped memory for tpu_custom_call.1']
    #allocation13 [shape = 'u8[512]{0}', space=vmem, size = 0x400, scoped, tag = 'input window, operand 6, single buffered']
    #allocation14 [shape = 'u8[65536]{0}', space=vmem, size = 0x10000, scoped, tag = 'input window, operand 7, single buffered']
    #allocation15 [shape = 's32[1]{0}', space=sflag, size = 0x4, scoped, tag = 'scoped memory for tpu_custom_call.1']
    #allocation16 [shape = 'u8[512]{0}', space=vmem, size = 0x400, scoped, tag = 'input window, operand 8, single buffered']
    #allocation17 [shape = 'u8[8192]{0}', space=vmem, size = 0x2000, scoped, tag = 'output window, operand 0, single buffered']
    %14 = vsyncpa [#allocation3], 0
    %15 = vsyncpa [#allocation6], 0
    %16 = vsyncpa [#allocation9], 0
    %17 = vsyncpa [#allocation12], 0
    %18 = vsyncpa [#allocation15], 0
    %19 = vsyncpa [#allocation4], 0
    // Predicated region
    $region2: #{tpu_custom_call.1} parent=1 // pred_check
      _
    $region3: #{tpu_custom_call.1} parent=1 // pred_check_branch
      %21 = sbr.rel (0) target = $region5
    $region4: #{tpu_custom_call.1} parent=1 // pred_region
      %s23 = ssub.s32 256, 256
      %24 = vsyncadd [#allocation3], %s23
      %s25 = sshll.u32 [#allocation2], 4
      %s26 = int_to_ptr.vmem [resolvable:$true] %s25
      %31 = dma.hbm_to_vmem [thread:$0]  %s0, 256, %s26, [#allocation3], 128, 128, 8
    $region5: #{tpu_custom_call.1} parent=1 // pred_fallthru
      _
    // Predicated region
    $region6: #{tpu_custom_call.1} parent=1 // pred_check
      _
    $region7: #{tpu_custom_call.1} parent=1 // pred_check_branch
      %33 = sbr.rel (0) target = $region9
    $region8: #{tpu_custom_call.1} parent=1 // pred_region
      %s35 = ssub.s32 2048, 2048
      %36 = vsyncadd [#allocation6], %s35
      %s37 = sshll.u32 [#allocation5], 4
      %s38 = int_to_ptr.vmem [resolvable:$true] %s37
      %43 = dma.hbm_to_vmem [thread:$0]  %s1, 2048, %s38, [#allocation6], 128, 128, 8
    $region9: #{tpu_custom_call.1} parent=1 // pred_fallthru
      _
    // Predicated region
    $region10: #{tpu_custom_call.1} parent=1 // pred_check
      _
    $region11: #{tpu_custom_call.1} parent=1 // pred_check_branch
      %45 = sbr.rel (0) target = $region13
    $region12: #{tpu_custom_call.1} parent=1 // pred_region
      %s47 = ssub.s32 16, 16
      %48 = vsyncadd [#allocation6], %s47
      %s50 = sshll.u32 [#allocation7], 4
      %s51 = int_to_ptr.vmem [resolvable:$true] %s50
      %53 = dma.hbm_to_vmem [thread:$0]  %s2, 16, %s51, [#allocation6]
    $region13: #{tpu_custom_call.1} parent=1 // pred_fallthru
      _
    // Predicated region
    $region14: #{tpu_custom_call.1} parent=1 // pred_check
      _
    $region15: #{tpu_custom_call.1} parent=1 // pred_check_branch
      %55 = sbr.rel (0) target = $region17
    $region16: #{tpu_custom_call.1} parent=1 // pred_region
      %s57 = ssub.s32 2048, 2048
      %58 = vsyncadd [#allocation9], %s57
      %s59 = sshll.u32 [#allocation8], 4
      %s60 = int_to_ptr.vmem [resolvable:$true] %s59
      %65 = dma.hbm_to_vmem [thread:$0]  %s3, 2048, %s60, [#allocation9], 128, 128, 8
    $region17: #{tpu_custom_call.1} parent=1 // pred_fallthru
      _
    // Predicated region
    $region18: #{tpu_custom_call.1} parent=1 // pred_check
      _
    $region19: #{tpu_custom_call.1} parent=1 // pred_check_branch
      %67 = sbr.rel (0) target = $region21
    $region20: #{tpu_custom_call.1} parent=1 // pred_region
      %s69 = ssub.s32 16, 16
      %70 = vsyncadd [#allocation9], %s69
      %s72 = sshll.u32 [#allocation10], 4
      %s73 = int_to_ptr.vmem [resolvable:$true] %s72
      %75 = dma.hbm_to_vmem [thread:$0]  %s4, 16, %s73, [#allocation9]
    $region21: #{tpu_custom_call.1} parent=1 // pred_fallthru
      _
    // Predicated region
    $region22: #{tpu_custom_call.1} parent=1 // pred_check
      _
    $region23: #{tpu_custom_call.1} parent=1 // pred_check_branch
      %77 = sbr.rel (0) target = $region25
    $region24: #{tpu_custom_call.1} parent=1 // pred_region
      %s79 = ssub.s32 2048, 2048
      %80 = vsyncadd [#allocation12], %s79
      %s81 = sshll.u32 [#allocation11], 4
      %s82 = int_to_ptr.vmem [resolvable:$true] %s81
      %87 = dma.hbm_to_vmem [thread:$0]  %s5, 2048, %s82, [#allocation12], 128, 128, 8
    $region25: #{tpu_custom_call.1} parent=1 // pred_fallthru
      _
    // Predicated region
    $region26: #{tpu_custom_call.1} parent=1 // pred_check
      _
    $region27: #{tpu_custom_call.1} parent=1 // pred_check_branch
      %89 = sbr.rel (0) target = $region29
    $region28: #{tpu_custom_call.1} parent=1 // pred_region
      %s91 = ssub.s32 16, 16
      %92 = vsyncadd [#allocation12], %s91
      %s94 = sshll.u32 [#allocation13], 4
      %s95 = int_to_ptr.vmem [resolvable:$true] %s94
      %97 = dma.hbm_to_vmem [thread:$0]  %s6, 16, %s95, [#allocation12]
    $region29: #{tpu_custom_call.1} parent=1 // pred_fallthru
      _
    // Predicated region
    $region30: #{tpu_custom_call.1} parent=1 // pred_check
      _
    $region31: #{tpu_custom_call.1} parent=1 // pred_check_branch
      %99 = sbr.rel (0) target = $region33
    $region32: #{tpu_custom_call.1} parent=1 // pred_region
      %s101 = ssub.s32 2048, 2048
      %102 = vsyncadd [#allocation15], %s101
      %s103 = sshll.u32 [#allocation14], 4
      %s104 = int_to_ptr.vmem [resolvable:$true] %s103
      %109 = dma.hbm_to_vmem [thread:$0]  %s7, 2048, %s104, [#allocation15], 128, 128, 8
    $region33: #{tpu_custom_call.1} parent=1 // pred_fallthru
      _
    // Predicated region
    $region34: #{tpu_custom_call.1} parent=1 // pred_check
      _
    $region35: #{tpu_custom_call.1} parent=1 // pred_check_branch
      %111 = sbr.rel (0) target = $region37
    $region36: #{tpu_custom_call.1} parent=1 // pred_region
      %s113 = ssub.s32 16, 16
      %114 = vsyncadd [#allocation15], %s113
      %s116 = sshll.u32 [#allocation16], 4
      %s117 = int_to_ptr.vmem [resolvable:$true] %s116
      %119 = dma.hbm_to_vmem [thread:$0]  %s8, 16, %s117, [#allocation15]
    $region37: #{tpu_custom_call.1} parent=1 // pred_fallthru
      _
    // Predicated region
    $region38: #{tpu_custom_call.1} parent=1 // pred_check
      _
    $region39: #{tpu_custom_call.1} parent=1 // pred_check_branch
      %121 = sbr.rel (0) target = $region41
    $region40: #{tpu_custom_call.1} parent=1 // pred_region
      %122 = dma.done [#allocation3], 256
    $region41: #{tpu_custom_call.1} parent=1 // pred_fallthru
      _
    // Predicated region
    $region42: #{tpu_custom_call.1} parent=1 // pred_check
      _
    $region43: #{tpu_custom_call.1} parent=1 // pred_check_branch
      %124 = sbr.rel (0) target = $region45
    $region44: #{tpu_custom_call.1} parent=1 // pred_region
      %125 = dma.done [#allocation6], 2048
    $region45: #{tpu_custom_call.1} parent=1 // pred_fallthru
      _
    // Predicated region
    $region46: #{tpu_custom_call.1} parent=1 // pred_check
      _
    $region47: #{tpu_custom_call.1} parent=1 // pred_check_branch
      %127 = sbr.rel (0) target = $region49
    $region48: #{tpu_custom_call.1} parent=1 // pred_region
      %128 = dma.done [#allocation6], 16
    $region49: #{tpu_custom_call.1} parent=1 // pred_fallthru
      _
    // Predicated region
    $region50: #{tpu_custom_call.1} parent=1 // pred_check
      _
    $region51: #{tpu_custom_call.1} parent=1 // pred_check_branch
      %130 = sbr.rel (0) target = $region53
    $region52: #{tpu_custom_call.1} parent=1 // pred_region
      %131 = dma.done [#allocation9], 2048
    $region53: #{tpu_custom_call.1} parent=1 // pred_fallthru
      _
    // Predicated region
    $region54: #{tpu_custom_call.1} parent=1 // pred_check
      _
    $region55: #{tpu_custom_call.1} parent=1 // pred_check_branch
      %133 = sbr.rel (0) target = $region57
    $region56: #{tpu_custom_call.1} parent=1 // pred_region
      %134 = dma.done [#allocation9], 16
    $region57: #{tpu_custom_call.1} parent=1 // pred_fallthru
      _
    // Predicated region
    $region58: #{tpu_custom_call.1} parent=1 // pred_check
      _
    $region59: #{tpu_custom_call.1} parent=1 // pred_check_branch
      %136 = sbr.rel (0) target = $region61
    $region60: #{tpu_custom_call.1} parent=1 // pred_region
      %137 = dma.done [#allocation12], 2048
    $region61: #{tpu_custom_call.1} parent=1 // pred_fallthru
      _
    // Predicated region
    $region62: #{tpu_custom_call.1} parent=1 // pred_check
      _
    $region63: #{tpu_custom_call.1} parent=1 // pred_check_branch
      %139 = sbr.rel (0) target = $region65
    $region64: #{tpu_custom_call.1} parent=1 // pred_region
      %140 = dma.done [#allocation12], 16
    $region65: #{tpu_custom_call.1} parent=1 // pred_fallthru
      _
    // Predicated region
    $region66: #{tpu_custom_call.1} parent=1 // pred_check
      _
    $region67: #{tpu_custom_call.1} parent=1 // pred_check_branch
      %142 = sbr.rel (0) target = $region69
    $region68: #{tpu_custom_call.1} parent=1 // pred_region
      %143 = dma.done [#allocation15], 2048
    $region69: #{tpu_custom_call.1} parent=1 // pred_fallthru
      _
    // Predicated region
    $region70: #{tpu_custom_call.1} parent=1 // pred_check
      _
    $region71: #{tpu_custom_call.1} parent=1 // pred_check_branch
      %145 = sbr.rel (0) target = $region73
    $region72: #{tpu_custom_call.1} parent=1 // pred_region
      %146 = dma.done [#allocation15], 16
    $region73: #{tpu_custom_call.1} parent=1 // pred_fallthru
      _
    %v147 = vld [vmem:[#allocation2] sm:$0xff]
    %v148 = vld [vmem:[#allocation2 + $0x8] sm:$0xff]
    %v149 = vld [vmem:[#allocation5] sm:$0xff]
    %v150 = vld [vmem:[#allocation5 + $0x8] sm:$0xff]
    %v151 = vld [vmem:[#allocation5 + $0x10] sm:$0xff]
    %v152 = vld [vmem:[#allocation5 + $0x18] sm:$0xff]
    %v153 = vld [vmem:[#allocation5 + $0x20] sm:$0xff]
    %v154 = vld [vmem:[#allocation5 + $0x28] sm:$0xff]
    %v155 = vld [vmem:[#allocation5 + $0x30] sm:$0xff]
    %v156 = vld [vmem:[#allocation5 + $0x38] sm:$0xff]
    %v157 = vld [vmem:[#allocation5 + $0x40] sm:$0xff]
    %v158 = vld [vmem:[#allocation5 + $0x48] sm:$0xff]
    %v159 = vld [vmem:[#allocation5 + $0x50] sm:$0xff]
    %v160 = vld [vmem:[#allocation5 + $0x58] sm:$0xff]
    %v161 = vld [vmem:[#allocation5 + $0x60] sm:$0xff]
    %v162 = vld [vmem:[#allocation5 + $0x68] sm:$0xff]
    %v163 = vld [vmem:[#allocation5 + $0x70] sm:$0xff]
    %v164 = vld [vmem:[#allocation5 + $0x78] sm:$0xff]
    %v165 = vld [vmem:[#allocation7] sm:$0x1]
    %v167 = vlaneseq
    %v168 = vshrl.u32 %v167, 7
    %v169 = vsub.s32 0, %v168
    %v170 = vrot.slane %v165, %v169
    %172 = vmatprep.subr.mxu0 0.0
    %173 = vmatpush1.msra.mxu0 %v149
    %174 = vmatprep.subr.mxu0 0.0
    %175 = vmatpush1.msra.mxu0 %v150
    %176 = vmatprep.subr.mxu0 0.0
    %177 = vmatpush1.msra.mxu0 %v151
    %178 = vmatprep.subr.mxu0 0.0
    %179 = vmatpush1.msra.mxu0 %v152
    %180 = vmatprep.subr.mxu0 0.0
    %181 = vmatpush1.msra.mxu0 %v153
    %182 = vmatprep.subr.mxu0 0.0
    %183 = vmatpush1.msra.mxu0 %v154
    %184 = vmatprep.subr.mxu0 0.0
    %185 = vmatpush1.msra.mxu0 %v155
    %186 = vmatprep.subr.mxu0 0.0
    %187 = vmatpush1.msra.mxu0 %v156
    %188 = vmatprep.subr.mxu0 0.0
    %189 = vmatpush1.msra.mxu0 %v157
    %190 = vmatprep.subr.mxu0 0.0
    %191 = vmatpush1.msra.mxu0 %v158
    %192 = vmatprep.subr.mxu0 0.0
    %193 = vmatpush1.msra.mxu0 %v159
    %194 = vmatprep.subr.mxu0 0.0
    %195 = vmatpush1.msra.mxu0 %v160
    %196 = vmatprep.subr.mxu0 0.0
    %197 = vmatpush1.msra.mxu0 %v161
    %198 = vmatprep.subr.mxu0 0.0
    %199 = vmatpush1.msra.mxu0 %v162
    %200 = vmatprep.subr.mxu0 0.0
    %201 = vmatpush1.msra.mxu0 %v163
    %202 = vmatprep.subr.mxu0 0.0
    %203 = vmatpush1.msra.mxu0 %v164
    %204 = vmatprep.subr.mxu0 0.0
    %205 = vmatpush1.msra.mxu0 0.0
    %206 = vmatprep.subr.mxu0 0.0
    %207 = vmatpush1.msra.mxu0 0.0
    %208 = vmatprep.subr.mxu0 0.0
    %209 = vmatpush1.msra.mxu0 0.0
    %210 = vmatprep.subr.mxu0 0.0
    %211 = vmatpush1.msra.mxu0 0.0
    %212 = vmatprep.subr.mxu0 0.0
    %213 = vmatpush1.msra.mxu0 0.0
    %214 = vmatprep.subr.mxu0 0.0
    %215 = vmatpush1.msra.mxu0 0.0
    %216 = vmatprep.subr.mxu0 0.0
    %217 = vmatpush1.msra.mxu0 0.0
    %218 = vmatprep.subr.mxu0 0.0
    %219 = vmatpush1.msra.mxu0 0.0
    %220 = vmatprep.subr.mxu0 0.0
    %221 = vmatpush1.msra.mxu0 0.0
    %222 = vmatprep.subr.mxu0 0.0
    %223 = vmatpush1.msra.mxu0 0.0
    %224 = vmatprep.subr.mxu0 0.0
    %225 = vmatpush1.msra.mxu0 0.0
    %226 = vmatprep.subr.mxu0 0.0
    %227 = vmatpush1.msra.mxu0 0.0
    %228 = vmatprep.subr.mxu0 0.0
    %229 = vmatpush1.msra.mxu0 0.0
    %230 = vmatprep.subr.mxu0 0.0
    %231 = vmatpush1.msra.mxu0 0.0
    %232 = vmatprep.subr.mxu0 0.0
    %233 = vmatpush1.msra.mxu0 0.0
    %234 = vmatprep.subr.mxu0 0.0
    %235 = vmatpush1.msra.mxu0 0.0
    %236 = vmatprep.mubr.f32.mxu0 0.0
    %237 = vmatmul.mubr.f32.gmra.mrb[0].mxu0 %v147
    %v238 = vpop.f32.mrb[0].mxu0
    %v239 = vadd.f32 %v170, %v238
    %v240 = vpop.f32.mrb[0].mxu0
    %241 = vmatprep.mubr.f32.mxu0 0.0
    %242 = vmatmul.mubr.f32.gmra.mrb[0].mxu0 %v148
    %v243 = vpop.f32.mrb[0].mxu0
    %v244 = vadd.f32 %v170, %v243
    %v245 = vpop.f32.mrb[0].mxu0
    %246 = vdwg.mxu0
    %v247 = vld [vmem:[#allocation8] sm:$0xff]
    %v248 = vld [vmem:[#allocation8 + $0x8] sm:$0xff]
    %v249 = vld [vmem:[#allocation8 + $0x10] sm:$0xff]
    %v250 = vld [vmem:[#allocation8 + $0x18] sm:$0xff]
    %v251 = vld [vmem:[#allocation8 + $0x20] sm:$0xff]
    %v252 = vld [vmem:[#allocation8 + $0x28] sm:$0xff]
    %v253 = vld [vmem:[#allocation8 + $0x30] sm:$0xff]
    %v254 = vld [vmem:[#allocation8 + $0x38] sm:$0xff]
    %v255 = vld [vmem:[#allocation8 + $0x40] sm:$0xff]
    %v256 = vld [vmem:[#allocation8 + $0x48] sm:$0xff]
    %v257 = vld [vmem:[#allocation8 + $0x50] sm:$0xff]
    %v258 = vld [vmem:[#allocation8 + $0x58] sm:$0xff]
    %v259 = vld [vmem:[#allocation8 + $0x60] sm:$0xff]
    %v260 = vld [vmem:[#allocation8 + $0x68] sm:$0xff]
    %v261 = vld [vmem:[#allocation8 + $0x70] sm:$0xff]
    %v262 = vld [vmem:[#allocation8 + $0x78] sm:$0xff]
    %v263 = vld [vmem:[#allocation10] sm:$0x1]
    %v265 = vlaneseq
    %v266 = vshrl.u32 %v265, 7
    %v267 = vsub.s32 0, %v266
    %v268 = vrot.slane %v263, %v267
    %270 = vmatprep.subr.mxu0 0.0
    %271 = vmatpush1.msra.mxu0 %v247
    %272 = vmatprep.subr.mxu0 0.0
    %273 = vmatpush1.msra.mxu0 %v248
    %274 = vmatprep.subr.mxu0 0.0
    %275 = vmatpush1.msra.mxu0 %v249
    %276 = vmatprep.subr.mxu0 0.0
    %277 = vmatpush1.msra.mxu0 %v250
    %278 = vmatprep.subr.mxu0 0.0
    %279 = vmatpush1.msra.mxu0 %v251
    %280 = vmatprep.subr.mxu0 0.0
    %281 = vmatpush1.msra.mxu0 %v252
    %282 = vmatprep.subr.mxu0 0.0
    %283 = vmatpush1.msra.mxu0 %v253
    %284 = vmatprep.subr.mxu0 0.0
    %285 = vmatpush1.msra.mxu0 %v254
    %286 = vmatprep.subr.mxu0 0.0
    %287 = vmatpush1.msra.mxu0 %v255
    %288 = vmatprep.subr.mxu0 0.0
    %289 = vmatpush1.msra.mxu0 %v256
    %290 = vmatprep.subr.mxu0 0.0
    %291 = vmatpush1.msra.mxu0 %v257
    %292 = vmatprep.subr.mxu0 0.0
    %293 = vmatpush1.msra.mxu0 %v258
    %294 = vmatprep.subr.mxu0 0.0
    %295 = vmatpush1.msra.mxu0 %v259
    %296 = vmatprep.subr.mxu0 0.0
    %297 = vmatpush1.msra.mxu0 %v260
    %298 = vmatprep.subr.mxu0 0.0
    %299 = vmatpush1.msra.mxu0 %v261
    %300 = vmatprep.subr.mxu0 0.0
    %301 = vmatpush1.msra.mxu0 %v262
    %302 = vmatprep.subr.mxu0 0.0
    %303 = vmatpush1.msra.mxu0 0.0
    %304 = vmatprep.subr.mxu0 0.0
    %305 = vmatpush1.msra.mxu0 0.0
    %306 = vmatprep.subr.mxu0 0.0
    %307 = vmatpush1.msra.mxu0 0.0
    %308 = vmatprep.subr.mxu0 0.0
    %309 = vmatpush1.msra.mxu0 0.0
    %310 = vmatprep.subr.mxu0 0.0
    %311 = vmatpush1.msra.mxu0 0.0
    %312 = vmatprep.subr.mxu0 0.0
    %313 = vmatpush1.msra.mxu0 0.0
    %314 = vmatprep.subr.mxu0 0.0
    %315 = vmatpush1.msra.mxu0 0.0
    %316 = vmatprep.subr.mxu0 0.0
    %317 = vmatpush1.msra.mxu0 0.0
    %318 = vmatprep.subr.mxu0 0.0
    %319 = vmatpush1.msra.mxu0 0.0
    %320 = vmatprep.subr.mxu0 0.0
    %321 = vmatpush1.msra.mxu0 0.0
    %322 = vmatprep.subr.mxu0 0.0
    %323 = vmatpush1.msra.mxu0 0.0
    %324 = vmatprep.subr.mxu0 0.0
    %325 = vmatpush1.msra.mxu0 0.0
    %326 = vmatprep.subr.mxu0 0.0
    %327 = vmatpush1.msra.mxu0 0.0
    %328 = vmatprep.subr.mxu0 0.0
    %329 = vmatpush1.msra.mxu0 0.0
    %330 = vmatprep.subr.mxu0 0.0
    %331 = vmatpush1.msra.mxu0 0.0
    %332 = vmatprep.subr.mxu0 0.0
    %333 = vmatpush1.msra.mxu0 0.0
    %334 = vmatprep.mubr.f32.mxu0 0.0
    %335 = vmatmul.mubr.f32.gmra.mrb[0].mxu0 %v239
    %v336 = vpop.f32.mrb[0].mxu0
    %v337 = vadd.f32 %v268, %v336
    %v338 = vpop.f32.mrb[0].mxu0
    %339 = vmatprep.mubr.f32.mxu0 0.0
    %340 = vmatmul.mubr.f32.gmra.mrb[0].mxu0 %v244
    %v341 = vpop.f32.mrb[0].mxu0
    %v342 = vadd.f32 %v268, %v341
    %v343 = vpop.f32.mrb[0].mxu0
    %344 = vdwg.mxu0
    %v345 = vmax.f32 %v337, 0.0
    %v346 = vmax.f32 %v342, 0.0
    %v347 = vadd.f32 %v345, %v239
    %v348 = vadd.f32 %v346, %v244
    %v349 = vld [vmem:[#allocation11] sm:$0xff]
    %v350 = vld [vmem:[#allocation11 + $0x8] sm:$0xff]
    %v351 = vld [vmem:[#allocation11 + $0x10] sm:$0xff]
    %v352 = vld [vmem:[#allocation11 + $0x18] sm:$0xff]
    %v353 = vld [vmem:[#allocation11 + $0x20] sm:$0xff]
    %v354 = vld [vmem:[#allocation11 + $0x28] sm:$0xff]
    %v355 = vld [vmem:[#allocation11 + $0x30] sm:$0xff]
    %v356 = vld [vmem:[#allocation11 + $0x38] sm:$0xff]
    %v357 = vld [vmem:[#allocation11 + $0x40] sm:$0xff]
    %v358 = vld [vmem:[#allocation11 + $0x48] sm:$0xff]
    %v359 = vld [vmem:[#allocation11 + $0x50] sm:$0xff]
    %v360 = vld [vmem:[#allocation11 + $0x58] sm:$0xff]
    %v361 = vld [vmem:[#allocation11 + $0x60] sm:$0xff]
    %v362 = vld [vmem:[#allocation11 + $0x68] sm:$0xff]
    %v363 = vld [vmem:[#allocation11 + $0x70] sm:$0xff]
    %v364 = vld [vmem:[#allocation11 + $0x78] sm:$0xff]
    %v365 = vld [vmem:[#allocation13] sm:$0x1]
    %v367 = vlaneseq
    %v368 = vshrl.u32 %v367, 7
    %v369 = vsub.s32 0, %v368
    %v370 = vrot.slane %v365, %v369
    %372 = vmatprep.subr.mxu0 0.0
    %373 = vmatpush1.msra.mxu0 %v349
    %374 = vmatprep.subr.mxu0 0.0
    %375 = vmatpush1.msra.mxu0 %v350
    %376 = vmatprep.subr.mxu0 0.0
    %377 = vmatpush1.msra.mxu0 %v351
    %378 = vmatprep.subr.mxu0 0.0
    %379 = vmatpush1.msra.mxu0 %v352
    %380 = vmatprep.subr.mxu0 0.0
    %381 = vmatpush1.msra.mxu0 %v353
    %382 = vmatprep.subr.mxu0 0.0
    %383 = vmatpush1.msra.mxu0 %v354
    %384 = vmatprep.subr.mxu0 0.0
    %385 = vmatpush1.msra.mxu0 %v355
    %386 = vmatprep.subr.mxu0 0.0
    %387 = vmatpush1.msra.mxu0 %v356
    %388 = vmatprep.subr.mxu0 0.0
    %389 = vmatpush1.msra.mxu0 %v357
    %390 = vmatprep.subr.mxu0 0.0
    %391 = vmatpush1.msra.mxu0 %v358
    %392 = vmatprep.subr.mxu0 0.0
    %393 = vmatpush1.msra.mxu0 %v359
    %394 = vmatprep.subr.mxu0 0.0
    %395 = vmatpush1.msra.mxu0 %v360
    %396 = vmatprep.subr.mxu0 0.0
    %397 = vmatpush1.msra.mxu0 %v361
    %398 = vmatprep.subr.mxu0 0.0
    %399 = vmatpush1.msra.mxu0 %v362
    %400 = vmatprep.subr.mxu0 0.0
    %401 = vmatpush1.msra.mxu0 %v363
    %402 = vmatprep.subr.mxu0 0.0
    %403 = vmatpush1.msra.mxu0 %v364
    %404 = vmatprep.subr.mxu0 0.0
    %405 = vmatpush1.msra.mxu0 0.0
    %406 = vmatprep.subr.mxu0 0.0
    %407 = vmatpush1.msra.mxu0 0.0
    %408 = vmatprep.subr.mxu0 0.0
    %409 = vmatpush1.msra.mxu0 0.0
    %410 = vmatprep.subr.mxu0 0.0
    %411 = vmatpush1.msra.mxu0 0.0
    %412 = vmatprep.subr.mxu0 0.0
    %413 = vmatpush1.msra.mxu0 0.0
    %414 = vmatprep.subr.mxu0 0.0
    %415 = vmatpush1.msra.mxu0 0.0
    %416 = vmatprep.subr.mxu0 0.0
    %417 = vmatpush1.msra.mxu0 0.0
    %418 = vmatprep.subr.mxu0 0.0
    %419 = vmatpush1.msra.mxu0 0.0
    %420 = vmatprep.subr.mxu0 0.0
    %421 = vmatpush1.msra.mxu0 0.0
    %422 = vmatprep.subr.mxu0 0.0
    %423 = vmatpush1.msra.mxu0 0.0
    %424 = vmatprep.subr.mxu0 0.0
    %425 = vmatpush1.msra.mxu0 0.0
    %426 = vmatprep.subr.mxu0 0.0
    %427 = vmatpush1.msra.mxu0 0.0
    %428 = vmatprep.subr.mxu0 0.0
    %429 = vmatpush1.msra.mxu0 0.0
    %430 = vmatprep.subr.mxu0 0.0
    %431 = vmatpush1.msra.mxu0 0.0
    %432 = vmatprep.subr.mxu0 0.0
    %433 = vmatpush1.msra.mxu0 0.0
    %434 = vmatprep.subr.mxu0 0.0
    %435 = vmatpush1.msra.mxu0 0.0
    %436 = vmatprep.mubr.f32.mxu0 0.0
    %437 = vmatmul.mubr.f32.gmra.mrb[0].mxu0 %v347
    %v438 = vpop.f32.mrb[0].mxu0
    %v439 = vadd.f32 %v370, %v438
    %v440 = vpop.f32.mrb[0].mxu0
    %441 = vmatprep.mubr.f32.mxu0 0.0
    %442 = vmatmul.mubr.f32.gmra.mrb[0].mxu0 %v348
    %v443 = vpop.f32.mrb[0].mxu0
    %v444 = vadd.f32 %v370, %v443
    %v445 = vpop.f32.mrb[0].mxu0
    %446 = vdwg.mxu0
    %v447 = vmax.f32 %v439, 0.0
    %v448 = vmax.f32 %v444, 0.0
    %v449 = vadd.f32 %v447, %v347
    %v450 = vadd.f32 %v448, %v348
    %v451 = vld [vmem:[#allocation14] sm:$0xff]
    %v452 = vld [vmem:[#allocation14 + $0x8] sm:$0xff]
    %v453 = vld [vmem:[#allocation14 + $0x10] sm:$0xff]
    %v454 = vld [vmem:[#allocation14 + $0x18] sm:$0xff]
    %v455 = vld [vmem:[#allocation14 + $0x20] sm:$0xff]
    %v456 = vld [vmem:[#allocation14 + $0x28] sm:$0xff]
    %v457 = vld [vmem:[#allocation14 + $0x30] sm:$0xff]
    %v458 = vld [vmem:[#allocation14 + $0x38] sm:$0xff]
    %v459 = vld [vmem:[#allocation14 + $0x40] sm:$0xff]
    %v460 = vld [vmem:[#allocation14 + $0x48] sm:$0xff]
    %v461 = vld [vmem:[#allocation14 + $0x50] sm:$0xff]
    %v462 = vld [vmem:[#allocation14 + $0x58] sm:$0xff]
    %v463 = vld [vmem:[#allocation14 + $0x60] sm:$0xff]
    %v464 = vld [vmem:[#allocation14 + $0x68] sm:$0xff]
    %v465 = vld [vmem:[#allocation14 + $0x70] sm:$0xff]
    %v466 = vld [vmem:[#allocation14 + $0x78] sm:$0xff]
    %v467 = vld [vmem:[#allocation16] sm:$0x1]
    %v469 = vlaneseq
    %v470 = vshrl.u32 %v469, 7
    %v471 = vsub.s32 0, %v470
    %v472 = vrot.slane %v467, %v471
    %474 = vmatprep.subr.mxu0 0.0
    %475 = vmatpush1.msra.mxu0 %v451
    %476 = vmatprep.subr.mxu0 0.0
    %477 = vmatpush1.msra.mxu0 %v452
    %478 = vmatprep.subr.mxu0 0.0
    %479 = vmatpush1.msra.mxu0 %v453
    %480 = vmatprep.subr.mxu0 0.0
    %481 = vmatpush1.msra.mxu0 %v454
    %482 = vmatprep.subr.mxu0 0.0
    %483 = vmatpush1.msra.mxu0 %v455
    %484 = vmatprep.subr.mxu0 0.0
    %485 = vmatpush1.msra.mxu0 %v456
    %486 = vmatprep.subr.mxu0 0.0
    %487 = vmatpush1.msra.mxu0 %v457
    %488 = vmatprep.subr.mxu0 0.0
    %489 = vmatpush1.msra.mxu0 %v458
    %490 = vmatprep.subr.mxu0 0.0
    %491 = vmatpush1.msra.mxu0 %v459
    %492 = vmatprep.subr.mxu0 0.0
    %493 = vmatpush1.msra.mxu0 %v460
    %494 = vmatprep.subr.mxu0 0.0
    %495 = vmatpush1.msra.mxu0 %v461
    %496 = vmatprep.subr.mxu0 0.0
    %497 = vmatpush1.msra.mxu0 %v462
    %498 = vmatprep.subr.mxu0 0.0
    %499 = vmatpush1.msra.mxu0 %v463
    %500 = vmatprep.subr.mxu0 0.0
    %501 = vmatpush1.msra.mxu0 %v464
    %502 = vmatprep.subr.mxu0 0.0
    %503 = vmatpush1.msra.mxu0 %v465
    %504 = vmatprep.subr.mxu0 0.0
    %505 = vmatpush1.msra.mxu0 %v466
    %506 = vmatprep.subr.mxu0 0.0
    %507 = vmatpush1.msra.mxu0 0.0
    %508 = vmatprep.subr.mxu0 0.0
    %509 = vmatpush1.msra.mxu0 0.0
    %510 = vmatprep.subr.mxu0 0.0
    %511 = vmatpush1.msra.mxu0 0.0
    %512 = vmatprep.subr.mxu0 0.0
    %513 = vmatpush1.msra.mxu0 0.0
    %514 = vmatprep.subr.mxu0 0.0
    %515 = vmatpush1.msra.mxu0 0.0
    %516 = vmatprep.subr.mxu0 0.0
    %517 = vmatpush1.msra.mxu0 0.0
    %518 = vmatprep.subr.mxu0 0.0
    %519 = vmatpush1.msra.mxu0 0.0
    %520 = vmatprep.subr.mxu0 0.0
    %521 = vmatpush1.msra.mxu0 0.0
    %522 = vmatprep.subr.mxu0 0.0
    %523 = vmatpush1.msra.mxu0 0.0
    %524 = vmatprep.subr.mxu0 0.0
    %525 = vmatpush1.msra.mxu0 0.0
    %526 = vmatprep.subr.mxu0 0.0
    %527 = vmatpush1.msra.mxu0 0.0
    %528 = vmatprep.subr.mxu0 0.0
    %529 = vmatpush1.msra.mxu0 0.0
    %530 = vmatprep.subr.mxu0 0.0
    %531 = vmatpush1.msra.mxu0 0.0
    %532 = vmatprep.subr.mxu0 0.0
    %533 = vmatpush1.msra.mxu0 0.0
    %534 = vmatprep.subr.mxu0 0.0
    %535 = vmatpush1.msra.mxu0 0.0
    %536 = vmatprep.subr.mxu0 0.0
    %537 = vmatpush1.msra.mxu0 0.0
    %538 = vmatprep.mubr.f32.mxu0 0.0
    %539 = vmatmul.mubr.f32.gmra.mrb[0].mxu0 %v449
    %v540 = vpop.f32.mrb[0].mxu0
    %v541 = vadd.f32 %v472, %v540
    %v542 = vpop.f32.mrb[0].mxu0
    %543 = vmatprep.mubr.f32.mxu0 0.0
    %544 = vmatmul.mubr.f32.gmra.mrb[0].mxu0 %v450
    %v545 = vpop.f32.mrb[0].mxu0
    %v546 = vadd.f32 %v472, %v545
    %v547 = vpop.f32.mrb[0].mxu0
    %548 = vdwg.mxu0
    %549 = vst [vmem:[#allocation17] sm:$0xff] %v541
    %550 = vst [vmem:[#allocation17 + $0x8] sm:$0xff] %v546
    // Predicated region
    $region74: #{tpu_custom_call.1} parent=1 // pred_check
      _
    $region75: #{tpu_custom_call.1} parent=1 // pred_check_branch
      %552 = sbr.rel (0) target = $region77
    $region76: #{tpu_custom_call.1} parent=1 // pred_region
      %s554 = ssub.s32 256, 256
      %555 = vsyncadd [#allocation4], %s554
      %s556 = sshll.u32 [#allocation17], 4
      %s557 = int_to_ptr.vmem [resolvable:$true] %s556
      %562 = dma.vmem_to_hbm [thread:$0]  %s557, 256, %s9, [#allocation4], 128, 128, 8
    $region77: #{tpu_custom_call.1} parent=1 // pred_fallthru
      _
    // Predicated region
    $region78: #{tpu_custom_call.1} parent=1 // pred_check
      _
    $region79: #{tpu_custom_call.1} parent=1 // pred_check_branch
      %564 = sbr.rel (0) target = $region81
    $region80: #{tpu_custom_call.1} parent=1 // pred_region
      %565 = dma.done [#allocation4], 256
    $region81: #{tpu_custom_call.1} parent=1 // pred_fallthru
      _
    %566 = vsyncpa [#allocation3], 1
    %567 = vsyncpa [#allocation6], 1
    %568 = vsyncpa [#allocation9], 1
    %569 = vsyncpa [#allocation12], 1
    %570 = vsyncpa [#allocation15], 1
    %571 = vsyncpa [#allocation4], 1

</llo_original>
